<compile_context>
chip_gen: v5e
topology: v5e:2x2
jax: 0.10.0
libtpu: 0.0.40
codegen_flags: <defaults>
</compile_context>

<pallas_src>
import functools

import jax
import jax.numpy as jnp
from jax.experimental import pallas as pl
from jax.experimental.pallas import tpu as pltpu


def _zeropad_kernel(x_ref, o_ref, *, copy_cols: int):
    # x_ref: (Nb, actual*hw)   o_ref: (Nb, projection*hw)
    # Two disjoint stores: real channels, then zeros only in the pad region.
    o_ref[:, :copy_cols] = x_ref[...]
    nb, out_cols = o_ref.shape
    pad_cols = out_cols - copy_cols
    if pad_cols > 0:  # static (trace-time) decision
        o_ref[:, copy_cols:] = jnp.zeros((nb, pad_cols), dtype=o_ref.dtype)


def _sublane_granule(dtype) -> int:
    # f32 -> 8, bf16 -> 16, int8/fp8 -> 32 packed sublanes.
    itemsize = jnp.dtype(dtype).itemsize
    return max(8, 32 // itemsize)


def _choose_block_rows(n: int, in_row_bytes: int, out_row_bytes: int,
                       granule: int,
                       budget_bytes: int = 6 * 1024 * 1024) -> int:
    """Pick rows-per-block so 2*(in_block + out_block) stays well under the
    smallest default scoped-VMEM budget (16 MiB on v5e), while keeping blocks
    large (hundreds of KiB+) so the kernel hits HBM bandwidth instead of
    per-grid-step overhead."""
    per_row = in_row_bytes + out_row_bytes
    max_rows = max(1, budget_bytes // per_row)
    if max_rows >= n:
        # Full batch in one block: block dim == full array dim is always legal.
        return n
    nb = (max_rows // granule) * granule
    return max(granule, nb)


def zero_pad(residual: jax.Array, actual: int, projection: int) -> jax.Array:
    """Pallas equivalent of ZeroPad.forward (NCHW input)."""
    assert residual.ndim == 4, "expected NCHW input"
    n, c, h, w = residual.shape
    assert c == actual, "The residual did not match the dimensions expected"
    assert projection >= actual, "projection must be >= actual (zero padding only)"

    hw = h * w
    in_cols = actual * hw
    out_cols = projection * hw
    itemsize = jnp.dtype(residual.dtype).itemsize

    # NCHW contiguity -> this reshape is a free view, no transpose.
    x = residual.reshape(n, in_cols)

    granule = _sublane_granule(residual.dtype)
    nb = _choose_block_rows(n, in_cols * itemsize, out_cols * itemsize, granule)
    grid = (pl.cdiv(n, nb),)

    kernel = functools.partial(_zeropad_kernel, copy_cols=in_cols)

    out = pl.pallas_call(
        kernel,
        out_shape=jax.ShapeDtypeStruct((n, out_cols), residual.dtype),
        grid_spec=pltpu.PrefetchScalarGridSpec(
            num_scalar_prefetch=0,
            grid=grid,
            in_specs=[pl.BlockSpec((nb, in_cols), lambda i: (i, 0))],
            out_specs=pl.BlockSpec((nb, out_cols), lambda i: (i, 0)),
        ),
        compiler_params=pltpu.CompilerParams(
            dimension_semantics=("parallel",),
        ),
        cost_estimate=pl.CostEstimate(
            flops=0,
            transcendentals=0,
            bytes_accessed=(in_cols + out_cols) * n * itemsize,
        ),
    )(x)

    return out.reshape(n, projection, h, w)


if __name__ == "__main__":
    key = jax.random.PRNGKey(0)
    N, ACTUAL, PROJECTION, H, W = 2, 4, 8, 16, 16

    residual = jax.random.normal(key, (N, ACTUAL, H, W), dtype=jnp.float32)

    out = jax.block_until_ready(zero_pad(residual, ACTUAL, PROJECTION))

    # Reference check (plain JAX, mirrors torch.nn.functional.pad semantics).
    ref = jnp.pad(residual, ((0, 0), (0, PROJECTION - ACTUAL), (0, 0), (0, 0)))
    assert out.shape == (N, PROJECTION, H, W)
    assert out.dtype == residual.dtype
    assert jnp.array_equal(out, ref)

    print("KERNEL_OK")
</pallas_src>

<mosaic_0001>
module attributes {stable_mosaic.version = 11 : i64} {
  func.func @_zeropad_kernel(%arg0: i32, %arg1: memref<2x1024xf32, #tpu.memory_space<vmem>>, %arg2: memref<2x2048xf32, #tpu.memory_space<vmem>>) attributes {dimension_semantics = [#tpu.dimension_semantics<parallel>], iteration_bounds = array<i64: 1>, scalar_prefetch = 0 : i64, scratch_operands = 0 : i64, tpu.core_type = #tpu.core_type<tc>, window_params = [{transform_indices = @transform_0, window_bounds = array<i64: 2, 1024>}, {transform_indices = @transform_1, window_bounds = array<i64: 2, 2048>}]} {
    %c0 = arith.constant 0 : index
    %c0_0 = arith.constant 0 : index
    %0 = vector.load %arg1[%c0, %c0_0] : memref<2x1024xf32, #tpu.memory_space<vmem>>, vector<2x1024xf32>
    %c0_1 = arith.constant 0 : index
    %c0_2 = arith.constant 0 : index
    %1 = vector.load %arg2[%c0_1, %c0_2] : memref<2x2048xf32, #tpu.memory_space<vmem>>, vector<2x1024xf32>
    tpu.vector_store %arg2[%c0_1, %c0_2], %0 {strides = array<i32>} : memref<2x2048xf32, #tpu.memory_space<vmem>>, vector<2x1024xf32>,
    %cst = arith.constant 0.000000e+00 : f32
    %2 = vector.broadcast %cst : f32 to vector<2x1024xf32>
    %c0_3 = arith.constant 0 : index
    %c1024 = arith.constant 1024 : index
    %3 = vector.load %arg2[%c0_3, %c1024] : memref<2x2048xf32, #tpu.memory_space<vmem>>, vector<2x1024xf32>
    tpu.vector_store %arg2[%c0_3, %c1024], %2 {strides = array<i32>} : memref<2x2048xf32, #tpu.memory_space<vmem>>, vector<2x1024xf32>,
    return
  }
  func.func @transform_0(%arg0: i32) -> (i32, i32) {
    %c0_i32 = arith.constant 0 : i32
    %c0_i32_0 = arith.constant 0 : i32
    return %arg0, %c0_i32 : i32, i32
  }
  func.func @transform_1(%arg0: i32) -> (i32, i32) {
    %c0_i32 = arith.constant 0 : i32
    %c0_i32_0 = arith.constant 0 : i32
    return %arg0, %c0_i32 : i32, i32
  }
}

</mosaic_0001>

<llo_original>
// kernel: tpu_custom_call.1
$region0: #{tpu_custom_call.1}
  #allocation0 [shape = 'u32[]', space=smem, size = 0x4, offset = 0x4, fixed_abs, tag = 'smem constant byte address 0x4 - core index']
  #allocation1 [shape = 'u32[72,128]{1,0:T(1,128)}', space=vmem, size = 0x9000, scoped, tag = 'internal scratch']
  %s0 = inlined_call_operand.hbm [shape: f32[2,1024], index: 0, kind: input, shape index: {}]
  %s1 = inlined_call_operand.hbm [shape: f32[2,2048], index: 1, kind: output, shape index: {}]
  %s2 = sld [smem:[#allocation0]]
  $region18: #{tpu_custom_call.1} parent=0
    _
  %s4 = ssub.s32 1, %s2
  %s5 = scalar_select 0, %s4, %s2
  $region1: #{tpu_custom_call.1} parent=0
    #allocation2 [shape = 'u8[8192]{0}', space=vmem, size = 0x2000, scoped, tag = 'input window, operand 0, single buffered']
    #allocation3 [shape = 's32[1]{0}', space=sflag, size = 0x4, scoped, tag = 'scoped memory for tpu_custom_call.1']
    #allocation4 [shape = 's32[1]{0}', space=sflag, size = 0x4, scoped, tag = 'scoped memory for tpu_custom_call.1']
    #allocation5 [shape = 'u8[16384]{0}', space=vmem, size = 0x4000, scoped, tag = 'output window, operand 0, single buffered']
    %6 = vsyncpa [#allocation3], 0
    %7 = vsyncpa [#allocation4], 0
    // Predicated region
    $region2: #{tpu_custom_call.1} parent=1 // pred_check
      _
    $region3: #{tpu_custom_call.1} parent=1 // pred_check_branch
      %9 = sbr.rel (0) target = $region5
    $region4: #{tpu_custom_call.1} parent=1 // pred_region
      %11 = vsyncadd [#allocation3], 0
      %s13 = sshll.u32 %s0, 4
      %s14 = int_to_ptr.hbm [resolvable:$true] %s13
      %s15 = sshll.u32 [#allocation2], 4
      %s16 = int_to_ptr.vmem [resolvable:$true] %s15
      %18 = dma.hbm_to_vmem [thread:$0]  %s14, 256, %s16, [#allocation3]
    $region5: #{tpu_custom_call.1} parent=1 // pred_fallthru
      _
    // Predicated region
    $region6: #{tpu_custom_call.1} parent=1 // pred_check
      _
    $region7: #{tpu_custom_call.1} parent=1 // pred_check_branch
      %20 = sbr.rel (0) target = $region9
    $region8: #{tpu_custom_call.1} parent=1 // pred_region
      %22 = dma.done [#allocation3], 256
    $region9: #{tpu_custom_call.1} parent=1 // pred_fallthru
      _
    %v23 = vld [vmem:[#allocation2] sm:$0xff]
    %v24 = vld [vmem:[#allocation2 + $0x8] sm:$0xff]
    %25 = vst [vmem:[#allocation5] sm:$0xff] %v23
    %26 = vst [vmem:[#allocation5 + $0x8] sm:$0xff] %v24
    %27 = vst [vmem:[#allocation5 + $0x10] sm:$0xff] 0.0
    %28 = vst [vmem:[#allocation5 + $0x18] sm:$0xff] 0.0
    // Predicated region
    $region10: #{tpu_custom_call.1} parent=1 // pred_check
      _
    $region11: #{tpu_custom_call.1} parent=1 // pred_check_branch
      %30 = sbr.rel (0) target = $region13
    $region12: #{tpu_custom_call.1} parent=1 // pred_region
      %32 = vsyncadd [#allocation4], 0
      %s34 = sshll.u32 [#allocation5], 4
      %s35 = int_to_ptr.vmem [resolvable:$true] %s34
      %s36 = sshll.u32 %s1, 4
      %s37 = int_to_ptr.hbm [resolvable:$true] %s36
      %39 = dma.vmem_to_hbm [thread:$0]  %s35, 512, %s37, [#allocation4]
    $region13: #{tpu_custom_call.1} parent=1 // pred_fallthru
      _
    // Predicated region
    $region14: #{tpu_custom_call.1} parent=1 // pred_check
      _
    $region15: #{tpu_custom_call.1} parent=1 // pred_check_branch
      %41 = sbr.rel (0) target = $region17
    $region16: #{tpu_custom_call.1} parent=1 // pred_region
      %43 = dma.done [#allocation4], 512
    $region17: #{tpu_custom_call.1} parent=1 // pred_fallthru
      _
    %44 = vsyncpa [#allocation3], 1
    %45 = vsyncpa [#allocation4], 1

</llo_original>
